<compile_context>
chip_gen: v7x
topology: tpu7x:2x2x1
jax: 0.10.0
libtpu: 0.0.40
codegen_flags: <defaults>
</compile_context>

<pallas_src>
import functools

import jax
import jax.numpy as jnp
from jax.experimental import pallas as pl
from jax.experimental.pallas import tpu as pltpu

_LANE = 128      # vreg lane width
_SUBLANE = 8     # vreg sublane count (f32)


def _round_up(x: int, m: int) -> int:
    return ((x + m - 1) // m) * m


# ---------------------------------------------------------------------------
# Fused kernel: a stack of ResidLinear layers applied to one row tile.
#   refs = (w_0, b_0, w_1, b_1, ..., w_{L-1}, b_{L-1}, o_ref)
# The activation `h` never leaves the chip between layers.
# ---------------------------------------------------------------------------
def _resid_linear_stack_kernel(x_ref, *refs, n_layers, matmul_dtype):
    o_ref = refs[-1]
    wb = refs[:-1]
    assert len(wb) == 2 * n_layers  # static (trace-time) check

    h = x_ref[...].astype(jnp.float32)
    for i in range(n_layers):                      # static unroll inside ONE kernel
        w = wb[2 * i][...]
        b = wb[2 * i + 1][...].astype(jnp.float32)  # (1, D) bias, broadcasts over rows
        y = jnp.dot(h.astype(matmul_dtype), w.astype(matmul_dtype),
                    preferred_element_type=jnp.float32)   # MXU, f32 accumulate
        h = y + b + h                               # bias + identity skip, all f32
    o_ref[...] = h.astype(o_ref.dtype)


# ---------------------------------------------------------------------------
# Wrapper: pads to (8, 128)-aligned tiles, tiles M, keeps weights resident.
# ---------------------------------------------------------------------------
def resid_linear_stack(x, weights, biases, *, tile_m=256,
                       matmul_dtype=jnp.float32, out_dtype=None):
    """Apply a fused stack of ResidLinear layers: h <- h @ W_i + b_i + h.

    x:        (..., D) float array
    weights:  list of (D, D) arrays, already laid out (in_features, out_features)
    biases:   list of (D,) arrays
    """
    assert len(weights) == len(biases) and len(weights) >= 1
    orig_shape = x.shape
    D = x.shape[-1]
    x2 = x.reshape(-1, D)
    M = x2.shape[0]
    out_dtype = out_dtype or x.dtype

    for w, b in zip(weights, biases):
        assert w.shape == (D, D), "ResidLinear requires nin == nout"
        assert b.shape == (D,)

    # Lane-dense / sublane-aligned padding.
    D_pad = _round_up(D, _LANE)
    M8 = _round_up(max(M, 1), _SUBLANE)
    tile_m = _round_up(min(tile_m, M8), _SUBLANE)   # conservative tile: fits v7x's
    M_pad = _round_up(M, tile_m)                    # 64 MiB VMEM with headroom

    xp = jnp.pad(x2, ((0, M_pad - M), (0, D_pad - D)))

    args = [xp]
    in_specs = [pl.BlockSpec((tile_m, D_pad), lambda i: (i, 0))]
    for w, b in zip(weights, biases):
        wp = jnp.pad(w, ((0, D_pad - D), (0, D_pad - D)))
        bp = jnp.pad(b, (0, D_pad - D)).reshape(1, D_pad)
        args += [wp, bp]
        # Weights / biases stay resident in VMEM across all row tiles.
        in_specs += [pl.BlockSpec((D_pad, D_pad), lambda i: (0, 0)),
                     pl.BlockSpec((1, D_pad), lambda i: (0, 0))]

    kernel = functools.partial(_resid_linear_stack_kernel,
                               n_layers=len(weights), matmul_dtype=matmul_dtype)

    out = pl.pallas_call(
        kernel,
        out_shape=jax.ShapeDtypeStruct((M_pad, D_pad), out_dtype),
        grid=(M_pad // tile_m,),
        in_specs=in_specs,
        out_specs=pl.BlockSpec((tile_m, D_pad), lambda i: (i, 0)),
        compiler_params=pltpu.CompilerParams(
            dimension_semantics=("parallel",)),   # 2 TCs on v7x; no-op on v5e/v6e
    )(*args)

    return out[:M, :D].reshape(orig_shape)


def resid_linear(x, w, b, **kw):
    """Single ResidLinear layer (the PyTorch module's forward): z = x @ w + b + x."""
    return resid_linear_stack(x, [w], [b], **kw)


# ---------------------------------------------------------------------------
# Reference (pure JAX, f32)
# ---------------------------------------------------------------------------
def resid_linear_ref(x, w, b):
    return x @ w + b + x


if __name__ == "__main__":
    key = jax.random.PRNGKey(0)
    batch, seq, hidden = 2, 8, 32          # nin == nout == hidden (ResidLinear requirement)

    k_w, k_b, k_x, k_stack = jax.random.split(key, 4)

    # PyTorch nn.Linear stores W as (out, in) and computes x @ W.T + b;
    # we pre-transpose once to (in, out) — numerically identical.
    w_torch = jax.random.normal(k_w, (hidden, hidden), jnp.float32) * 0.05
    b = jax.random.normal(k_b, (hidden,), jnp.float32) * 0.05
    w = w_torch.T

    x = jax.random.normal(k_x, (batch, seq, hidden), jnp.float32)

    # --- single ResidLinear layer (the module's forward) --------------------
    z = jax.block_until_ready(resid_linear(x, w, b))
    z_ref = resid_linear_ref(x, w, b)
    assert z.shape == x.shape, z.shape
    assert jnp.allclose(z, z_ref, atol=1e-5, rtol=1e-5), "ResidLinear mismatch"

    # --- 3 stacked ResidLinear layers fused into ONE pallas_call ------------
    # (demonstrates the layer-fusion path: activation stays on-chip between layers)
    ws, bs = [], []
    for kk in jax.random.split(k_stack, 3):
        kw_, kb_ = jax.random.split(kk)
        ws.append((jax.random.normal(kw_, (hidden, hidden), jnp.float32) * 0.05).T)
        bs.append(jax.random.normal(kb_, (hidden,), jnp.float32) * 0.05)

    z_stack = jax.block_until_ready(resid_linear_stack(x, ws, bs))
    h_ref = x
    for wi, bi in zip(ws, bs):
        h_ref = resid_linear_ref(h_ref, wi, bi)
    assert jnp.allclose(z_stack, h_ref, atol=1e-4, rtol=1e-4), "stack mismatch"

    # TODO(synk): optional bf16 matmul path (matmul_dtype=jnp.bfloat16) is provided
    # for v6e/v7x but the demo validates the exact f32 path.
    print("KERNEL_OK")
</pallas_src>

<mosaic_0001>
module attributes {stable_mosaic.version = 11 : i64} {
  func.func @_resid_linear_stack_kernel(%arg0: i32, %arg1: memref<16x128xf32, #tpu.memory_space<vmem>>, %arg2: memref<128x128xf32, #tpu.memory_space<vmem>>, %arg3: memref<1x128xf32, #tpu.memory_space<vmem>>, %arg4: memref<16x128xf32, #tpu.memory_space<vmem>>) attributes {dimension_semantics = [#tpu.dimension_semantics<parallel>], iteration_bounds = array<i64: 1>, scalar_prefetch = 0 : i64, scratch_operands = 0 : i64, tpu.core_type = #tpu.core_type<tc>, window_params = [{transform_indices = @transform_0, window_bounds = array<i64: 16, 128>}, {pipeline_mode = #tpu.pipeline_mode<synchronous>, transform_indices = @transform_1, window_bounds = array<i64: 128, 128>}, {pipeline_mode = #tpu.pipeline_mode<synchronous>, transform_indices = @transform_2, window_bounds = array<i64: 1, 128>}, {transform_indices = @transform_3, window_bounds = array<i64: 16, 128>}]} {
    %c0 = arith.constant 0 : index
    %c0_0 = arith.constant 0 : index
    %0 = vector.load %arg1[%c0, %c0_0] : memref<16x128xf32, #tpu.memory_space<vmem>>, vector<16x128xf32>
    %c0_1 = arith.constant 0 : index
    %c0_2 = arith.constant 0 : index
    %1 = vector.load %arg2[%c0_1, %c0_2] : memref<128x128xf32, #tpu.memory_space<vmem>>, vector<128x128xf32>
    %c0_3 = arith.constant 0 : index
    %c0_4 = arith.constant 0 : index
    %2 = vector.load %arg3[%c0_3, %c0_4] : memref<1x128xf32, #tpu.memory_space<vmem>>, vector<1x128xf32>
    %cst = arith.constant dense<0.000000e+00> : vector<16x128xf32>
    %3 = tpu.matmul %0, %1, %cst {dimension_numbers = #tpu.dot_dimension_numbers<[1], [0], [0], [1], [0, 0, 1, 1], [], []>} : vector<16x128xf32>, vector<128x128xf32>, vector<16x128xf32> -> vector<16x128xf32>
    %4 = vector.broadcast %2 : vector<1x128xf32> to vector<16x128xf32>
    %5 = arith.addf %3, %4 : vector<16x128xf32>
    %6 = arith.addf %5, %0 : vector<16x128xf32>
    %c0_5 = arith.constant 0 : index
    %c0_6 = arith.constant 0 : index
    %7 = vector.load %arg4[%c0_5, %c0_6] : memref<16x128xf32, #tpu.memory_space<vmem>>, vector<16x128xf32>
    tpu.vector_store %arg4[%c0_5, %c0_6], %6 {strides = array<i32>} : memref<16x128xf32, #tpu.memory_space<vmem>>, vector<16x128xf32>,
    return
  }
  func.func @transform_0(%arg0: i32) -> (i32, i32) {
    %c0_i32 = arith.constant 0 : i32
    %c0_i32_0 = arith.constant 0 : i32
    return %arg0, %c0_i32 : i32, i32
  }
  func.func @transform_1(%arg0: i32) -> (i32, i32) {
    %c0_i32 = arith.constant 0 : i32
    %c0_i32_0 = arith.constant 0 : i32
    %c0_i32_1 = arith.constant 0 : i32
    return %c0_i32, %c0_i32_0 : i32, i32
  }
  func.func @transform_2(%arg0: i32) -> (i32, i32) {
    %c0_i32 = arith.constant 0 : i32
    %c0_i32_0 = arith.constant 0 : i32
    %c0_i32_1 = arith.constant 0 : i32
    return %c0_i32, %c0_i32_0 : i32, i32
  }
  func.func @transform_3(%arg0: i32) -> (i32, i32) {
    %c0_i32 = arith.constant 0 : i32
    %c0_i32_0 = arith.constant 0 : i32
    return %arg0, %c0_i32 : i32, i32
  }
}

</mosaic_0001>

<llo_original>
// kernel: tpu_custom_call.1
$region0: #{tpu_custom_call.1}
  #allocation0 [shape = 'u32[]', space=smem, size = 0x4, offset = 0x4, fixed_abs, tag = 'smem constant byte address 0x4 - core index']
  #allocation1 [shape = 'u32[144,128]{1,0:T(1,128)}', space=vmem, size = 0x12000, scoped, tag = 'internal scratch']
  %s0 = inlined_call_operand.hbm [shape: f32[16,128], index: 0, kind: input, shape index: {}]
  %s1 = inlined_call_operand.hbm [shape: f32[128,128], index: 1, kind: input, shape index: {}]
  %s2 = inlined_call_operand.vmem [shape: f32[1,128], index: 2, kind: input, shape index: {}]
  %s3 = inlined_call_operand.hbm [shape: f32[16,128], index: 3, kind: output, shape index: {}]
  %s4 = sld [smem:[#allocation0]]
  $region30: #{tpu_custom_call.1} parent=0
    _
  %s6 = ssub.s32 1, %s4
  %s7 = scalar_select 0, %s6, %s4
  $region1: #{tpu_custom_call.1} parent=0
    #allocation2 [shape = 'u8[8192]{0}', space=vmem, size = 0x2000, scoped, tag = 'input window, operand 0, single buffered']
    #allocation3 [shape = 's32[1]{0}', space=sflag, size = 0x4, scoped, tag = 'scoped memory for tpu_custom_call.1']
    #allocation4 [shape = 's32[1]{0}', space=sflag, size = 0x4, scoped, tag = 'scoped memory for tpu_custom_call.1']
    #allocation5 [shape = 'u8[65536]{0}', space=vmem, size = 0x10000, scoped, tag = 'input window, operand 1, single buffered']
    #allocation6 [shape = 's32[1]{0}', space=sflag, size = 0x4, scoped, tag = 'scoped memory for tpu_custom_call.1']
    #allocation7 [shape = 'u8[8192]{0}', space=vmem, size = 0x2000, scoped, tag = 'output window, operand 0, single buffered']
    %8 = vsyncpa [#allocation3], 0
    %9 = vsyncpa [#allocation6], 0
    %10 = vsyncpa [#allocation4], 0
    // Predicated region
    $region2: #{tpu_custom_call.1} parent=1 // pred_check
      _
    $region3: #{tpu_custom_call.1} parent=1 // pred_check_branch
      %12 = sbr.rel (0) target = $region5
    $region4: #{tpu_custom_call.1} parent=1 // pred_region
      %s14 = ssub.s32 256, 256
      %15 = vsyncadd [#allocation3], %s14
      %s16 = sshll.u32 [#allocation2], 4
      %s17 = int_to_ptr.vmem [resolvable:$true] %s16
      %22 = dma.hbm_to_vmem [thread:$0]  %s0, 256, %s17, [#allocation3], 128, 128, 8
    $region5: #{tpu_custom_call.1} parent=1 // pred_fallthru
      _
    // Predicated region
    $region6: #{tpu_custom_call.1} parent=1 // pred_check
      _
    $region7: #{tpu_custom_call.1} parent=1 // pred_check_branch
      %24 = sbr.rel (0) target = $region9
    $region8: #{tpu_custom_call.1} parent=1 // pred_region
      %s26 = ssub.s32 2048, 2048
      %27 = vsyncadd [#allocation6], %s26
      %s28 = sshll.u32 [#allocation5], 4
      %s29 = int_to_ptr.vmem [resolvable:$true] %s28
      %34 = dma.hbm_to_vmem [thread:$0]  %s1, 2048, %s29, [#allocation6], 128, 128, 8
    $region9: #{tpu_custom_call.1} parent=1 // pred_fallthru
      _
    // Predicated region
    $region10: #{tpu_custom_call.1} parent=1 // pred_check
      _
    $region11: #{tpu_custom_call.1} parent=1 // pred_check_branch
      %36 = sbr.rel (0) target = $region13
    $region12: #{tpu_custom_call.1} parent=1 // pred_region
      _
    $region13: #{tpu_custom_call.1} parent=1 // pred_fallthru
      _
    // Predicated region
    $region14: #{tpu_custom_call.1} parent=1 // pred_check
      _
    $region15: #{tpu_custom_call.1} parent=1 // pred_check_branch
      %38 = sbr.rel (0) target = $region17
    $region16: #{tpu_custom_call.1} parent=1 // pred_region
      %39 = dma.done [#allocation3], 256
    $region17: #{tpu_custom_call.1} parent=1 // pred_fallthru
      _
    // Predicated region
    $region18: #{tpu_custom_call.1} parent=1 // pred_check
      _
    $region19: #{tpu_custom_call.1} parent=1 // pred_check_branch
      %41 = sbr.rel (0) target = $region21
    $region20: #{tpu_custom_call.1} parent=1 // pred_region
      %42 = dma.done [#allocation6], 2048
    $region21: #{tpu_custom_call.1} parent=1 // pred_fallthru
      _
    %v43 = vld [vmem:[#allocation2] sm:$0xff]
    %v44 = vld [vmem:[#allocation2 + $0x8] sm:$0xff]
    %v45 = vld [vmem:[#allocation5] sm:$0xff]
    %v46 = vld [vmem:[#allocation5 + $0x8] sm:$0xff]
    %v47 = vld [vmem:[#allocation5 + $0x10] sm:$0xff]
    %v48 = vld [vmem:[#allocation5 + $0x18] sm:$0xff]
    %v49 = vld [vmem:[#allocation5 + $0x20] sm:$0xff]
    %v50 = vld [vmem:[#allocation5 + $0x28] sm:$0xff]
    %v51 = vld [vmem:[#allocation5 + $0x30] sm:$0xff]
    %v52 = vld [vmem:[#allocation5 + $0x38] sm:$0xff]
    %v53 = vld [vmem:[#allocation5 + $0x40] sm:$0xff]
    %v54 = vld [vmem:[#allocation5 + $0x48] sm:$0xff]
    %v55 = vld [vmem:[#allocation5 + $0x50] sm:$0xff]
    %v56 = vld [vmem:[#allocation5 + $0x58] sm:$0xff]
    %v57 = vld [vmem:[#allocation5 + $0x60] sm:$0xff]
    %v58 = vld [vmem:[#allocation5 + $0x68] sm:$0xff]
    %v59 = vld [vmem:[#allocation5 + $0x70] sm:$0xff]
    %v60 = vld [vmem:[#allocation5 + $0x78] sm:$0xff]
    %v61 = vld [vmem:[%s2] sm:$0x1]
    %v63 = vlaneseq
    %v64 = vshrl.u32 %v63, 7
    %v65 = vsub.s32 0, %v64
    %v66 = vrot.slane %v61, %v65
    %68 = vmatprep.subr.mxu0 0.0
    %69 = vmatpush1.msra.mxu0 %v45
    %70 = vmatprep.subr.mxu0 0.0
    %71 = vmatpush1.msra.mxu0 %v46
    %72 = vmatprep.subr.mxu0 0.0
    %73 = vmatpush1.msra.mxu0 %v47
    %74 = vmatprep.subr.mxu0 0.0
    %75 = vmatpush1.msra.mxu0 %v48
    %76 = vmatprep.subr.mxu0 0.0
    %77 = vmatpush1.msra.mxu0 %v49
    %78 = vmatprep.subr.mxu0 0.0
    %79 = vmatpush1.msra.mxu0 %v50
    %80 = vmatprep.subr.mxu0 0.0
    %81 = vmatpush1.msra.mxu0 %v51
    %82 = vmatprep.subr.mxu0 0.0
    %83 = vmatpush1.msra.mxu0 %v52
    %84 = vmatprep.subr.mxu0 0.0
    %85 = vmatpush1.msra.mxu0 %v53
    %86 = vmatprep.subr.mxu0 0.0
    %87 = vmatpush1.msra.mxu0 %v54
    %88 = vmatprep.subr.mxu0 0.0
    %89 = vmatpush1.msra.mxu0 %v55
    %90 = vmatprep.subr.mxu0 0.0
    %91 = vmatpush1.msra.mxu0 %v56
    %92 = vmatprep.subr.mxu0 0.0
    %93 = vmatpush1.msra.mxu0 %v57
    %94 = vmatprep.subr.mxu0 0.0
    %95 = vmatpush1.msra.mxu0 %v58
    %96 = vmatprep.subr.mxu0 0.0
    %97 = vmatpush1.msra.mxu0 %v59
    %98 = vmatprep.subr.mxu0 0.0
    %99 = vmatpush1.msra.mxu0 %v60
    %100 = vmatprep.subr.mxu0 0.0
    %101 = vmatpush1.msra.mxu0 0.0
    %102 = vmatprep.subr.mxu0 0.0
    %103 = vmatpush1.msra.mxu0 0.0
    %104 = vmatprep.subr.mxu0 0.0
    %105 = vmatpush1.msra.mxu0 0.0
    %106 = vmatprep.subr.mxu0 0.0
    %107 = vmatpush1.msra.mxu0 0.0
    %108 = vmatprep.subr.mxu0 0.0
    %109 = vmatpush1.msra.mxu0 0.0
    %110 = vmatprep.subr.mxu0 0.0
    %111 = vmatpush1.msra.mxu0 0.0
    %112 = vmatprep.subr.mxu0 0.0
    %113 = vmatpush1.msra.mxu0 0.0
    %114 = vmatprep.subr.mxu0 0.0
    %115 = vmatpush1.msra.mxu0 0.0
    %116 = vmatprep.subr.mxu0 0.0
    %117 = vmatpush1.msra.mxu0 0.0
    %118 = vmatprep.subr.mxu0 0.0
    %119 = vmatpush1.msra.mxu0 0.0
    %120 = vmatprep.subr.mxu0 0.0
    %121 = vmatpush1.msra.mxu0 0.0
    %122 = vmatprep.subr.mxu0 0.0
    %123 = vmatpush1.msra.mxu0 0.0
    %124 = vmatprep.subr.mxu0 0.0
    %125 = vmatpush1.msra.mxu0 0.0
    %126 = vmatprep.subr.mxu0 0.0
    %127 = vmatpush1.msra.mxu0 0.0
    %128 = vmatprep.subr.mxu0 0.0
    %129 = vmatpush1.msra.mxu0 0.0
    %130 = vmatprep.subr.mxu0 0.0
    %131 = vmatpush1.msra.mxu0 0.0
    %132 = vmatprep.mubr.f32.mxu0 0.0
    %133 = vmatmul.mubr.f32.gmra.mrb[0].mxu0 %v43
    %v134 = vpop.f32.mrb[0].mxu0
    %v135 = vadd.f32 %v66, %v134
    %v136 = vpop.f32.mrb[0].mxu0
    %137 = vmatprep.mubr.f32.mxu0 0.0
    %138 = vmatmul.mubr.f32.gmra.mrb[0].mxu0 %v44
    %v139 = vpop.f32.mrb[0].mxu0
    %v140 = vadd.f32 %v66, %v139
    %v141 = vpop.f32.mrb[0].mxu0
    %142 = vdwg.mxu0
    %v143 = vadd.f32 %v135, %v43
    %v144 = vadd.f32 %v140, %v44
    %145 = vst [vmem:[#allocation7] sm:$0xff] %v143
    %146 = vst [vmem:[#allocation7 + $0x8] sm:$0xff] %v144
    // Predicated region
    $region22: #{tpu_custom_call.1} parent=1 // pred_check
      _
    $region23: #{tpu_custom_call.1} parent=1 // pred_check_branch
      %148 = sbr.rel (0) target = $region25
    $region24: #{tpu_custom_call.1} parent=1 // pred_region
      %s150 = ssub.s32 256, 256
      %151 = vsyncadd [#allocation4], %s150
      %s152 = sshll.u32 [#allocation7], 4
      %s153 = int_to_ptr.vmem [resolvable:$true] %s152
      %158 = dma.vmem_to_hbm [thread:$0]  %s153, 256, %s3, [#allocation4], 128, 128, 8
    $region25: #{tpu_custom_call.1} parent=1 // pred_fallthru
      _
    // Predicated region
    $region26: #{tpu_custom_call.1} parent=1 // pred_check
      _
    $region27: #{tpu_custom_call.1} parent=1 // pred_check_branch
      %160 = sbr.rel (0) target = $region29
    $region28: #{tpu_custom_call.1} parent=1 // pred_region
      %161 = dma.done [#allocation4], 256
    $region29: #{tpu_custom_call.1} parent=1 // pred_fallthru
      _
    %162 = vsyncpa [#allocation3], 1
    %163 = vsyncpa [#allocation6], 1
    %164 = vsyncpa [#allocation4], 1

</llo_original>
